<compile_context>
chip_gen: v5e
topology: v5e:2x2
jax: 0.10.0
libtpu: 0.0.40
codegen_flags: <defaults>
</compile_context>

<pallas_src>
import functools

import jax
import jax.numpy as jnp
import numpy as np
from jax.experimental import pallas as pl
from jax.experimental.pallas import tpu as pltpu


# ----------------------------------------------------------------------------
# Kernel 1: streaming per-channel sum over HW (bandwidth-bound).
# ----------------------------------------------------------------------------
def _make_reduce_kernel(hw_total, tile_hw, needs_mask):
    def reduce_kernel(x_ref, sum_ref):
        # x_ref:   (1, C_in, TILE_HW)  one batch element, one spatial tile
        # sum_ref: (1, C_in, 1) f32    resident accumulator (same block over h)
        h = pl.program_id(1)
        last = pl.num_programs(1) - 1

        @pl.when(h == 0)
        def _():
            sum_ref[...] = jnp.zeros_like(sum_ref)

        if needs_mask:
            # Steady-state tiles: plain sum, no mask work on the hot path.
            @pl.when(h < last)
            def _():
                sum_ref[...] += jnp.sum(x_ref[...], axis=2, keepdims=True,
                                        dtype=jnp.float32)

            # Last tile only: mask the lanes past HW so the mean stays exact.
            # Predicate built from a (1, 1, TILE_HW) iota (broadcast in where),
            # not a full (C_in, TILE_HW) iota.
            @pl.when(h == last)
            def _():
                x = x_ref[...]
                col = jax.lax.broadcasted_iota(jnp.int32, (1, 1, tile_hw), 2)
                valid = col < (hw_total - h * tile_hw)
                x = jnp.where(valid, x, jnp.zeros_like(x))
                sum_ref[...] += jnp.sum(x, axis=2, keepdims=True,
                                        dtype=jnp.float32)
        else:
            sum_ref[...] += jnp.sum(x_ref[...], axis=2, keepdims=True,
                                    dtype=jnp.float32)

    return reduce_kernel


# ----------------------------------------------------------------------------
# Kernel 2: mean -> 1x1 conv (BN scale folded) -> shift -> ReLU.  One tiny call.
# ----------------------------------------------------------------------------
def _fuse_kernel(s_ref, w_ref, b_ref, y_ref, *, inv_hw):
    # s_ref: (N, C_in) f32 channel sums; w_ref: (C_in, C_out) fused weight;
    # b_ref: (1, C_out) shift; y_ref: (N, C_out) f32 result.
    mean = s_ref[...] * inv_hw                                   # divide before dot
    y = jnp.dot(mean, w_ref[...], preferred_element_type=jnp.float32)
    y_ref[...] = jnp.maximum(y + b_ref[...], 0.0)


# ----------------------------------------------------------------------------
# Kernel 3: broadcast the tiny per-image vector back over HW (store-bound).
# ----------------------------------------------------------------------------
def _broadcast_kernel(y_ref, o_ref):
    # y_ref: (1, C_out, 1); o_ref: (1, C_out, TILE_OUT) lane-dense output tile.
    o_ref[...] = jnp.broadcast_to(y_ref[...].astype(o_ref.dtype), o_ref.shape)


# ----------------------------------------------------------------------------
# Tiling / VMEM helpers.
# ----------------------------------------------------------------------------
def _vmem_limit_bytes():
    cap = None
    try:
        cap = getattr(pltpu.get_tpu_info(), "vmem_capacity_bytes", None)
    except Exception:
        cap = None
    if not cap:
        cap = 64 * 1024 * 1024          # conservative (v7x per-TC physical VMEM)
    return int(min(cap // 2, 64 * 1024 * 1024))


def _pick_lane_tile(total, rows, itemsize, target_bytes, cap_lanes=None):
    """Byte-targeted lane-axis tile: multiple of 128, or the full extent."""
    lanes = target_bytes // max(1, rows * itemsize)
    if cap_lanes is not None:
        lanes = min(lanes, cap_lanes)
    if lanes >= total:
        return total                    # one block covering the full extent
    lanes = max(128, (lanes // 128) * 128)
    return min(lanes, max(128, (total // 128) * 128))


# ----------------------------------------------------------------------------
# Wrapper.
# ----------------------------------------------------------------------------
def aspp_pooling(x_nchw, w_conv, gamma, beta, running_mean, running_var,
                 eps=1e-5, reduce_tile_cap=None, out_tile_cap=None):
    """x_nchw: (N, C_in, H, W); w_conv: (C_out, C_in, 1, 1). Returns NCHW."""
    N, C_in, H, W = x_nchw.shape
    C_out = w_conv.shape[0]
    HW = H * W
    itemsize = int(np.dtype(x_nchw.dtype).itemsize)

    vmem_limit = _vmem_limit_bytes()
    x_target_bytes = (8 << 20) if vmem_limit >= (64 << 20) else (4 << 20)
    out_target_bytes = 8 << 20

    # Free (metadata-only) reshape: keep the native NCHW layout.
    x_flat = x_nchw.reshape(N, C_in, HW)

    # Fold BN into an affine; fold the scale into the conv weight.
    scale = (gamma.astype(jnp.float32)
             / jnp.sqrt(running_var.astype(jnp.float32) + eps))            # (C_out,)
    shift_row = (beta.astype(jnp.float32)
                 - running_mean.astype(jnp.float32) * scale).reshape(1, C_out)
    w_fused = (w_conv[:, :, 0, 0].astype(jnp.float32) * scale[:, None]).T   # (C_in, C_out)

    # ---- Kernel 1: streaming channel-sum reduction --------------------------
    TILE_HW = _pick_lane_tile(HW, C_in, itemsize, x_target_bytes,
                              cap_lanes=reduce_tile_cap)
    num_hw_tiles = pl.cdiv(HW, TILE_HW)
    needs_mask = (HW % TILE_HW) != 0

    sums = pl.pallas_call(
        _make_reduce_kernel(HW, TILE_HW, needs_mask),
        out_shape=jax.ShapeDtypeStruct((N, C_in, 1), jnp.float32),
        grid_spec=pltpu.PrefetchScalarGridSpec(
            num_scalar_prefetch=0,
            grid=(N, num_hw_tiles),
            in_specs=[pl.BlockSpec((1, C_in, TILE_HW), lambda n, h: (n, 0, h))],
            out_specs=pl.BlockSpec((1, C_in, 1), lambda n, h: (n, 0, 0)),
        ),
        compiler_params=pltpu.CompilerParams(
            dimension_semantics=("parallel", "arbitrary"),
            vmem_limit_bytes=vmem_limit,
        ),
        cost_estimate=pl.CostEstimate(
            flops=int(N * C_in * HW),
            transcendentals=0,
            bytes_accessed=int(N * C_in * HW * itemsize + N * C_in * 4),
        ),
    )(x_flat)

    # ---- Kernel 2: mean -> conv(+BN scale) -> shift -> ReLU (tiny) ----------
    y = pl.pallas_call(
        functools.partial(_fuse_kernel, inv_hw=float(1.0 / HW)),
        out_shape=jax.ShapeDtypeStruct((N, C_out), jnp.float32),
        in_specs=[pl.BlockSpec(memory_space=pltpu.MemorySpace.VMEM)] * 3,
        out_specs=pl.BlockSpec(memory_space=pltpu.MemorySpace.VMEM),
        cost_estimate=pl.CostEstimate(
            flops=int(2 * N * C_in * C_out),
            transcendentals=0,
            bytes_accessed=int(4 * (N * C_in + C_in * C_out + C_out + N * C_out)),
        ),
    )(sums.reshape(N, C_in), w_fused, shift_row)

    # ---- Kernel 3: broadcast write (never touches x again) ------------------
    TILE_OUT = _pick_lane_tile(HW, C_out, itemsize, out_target_bytes,
                               cap_lanes=out_tile_cap)
    num_out_tiles = pl.cdiv(HW, TILE_OUT)

    out = pl.pallas_call(
        _broadcast_kernel,
        out_shape=jax.ShapeDtypeStruct((N, C_out, HW), x_nchw.dtype),
        grid_spec=pltpu.PrefetchScalarGridSpec(
            num_scalar_prefetch=0,
            grid=(N, num_out_tiles),
            in_specs=[pl.BlockSpec((1, C_out, 1), lambda n, t: (n, 0, 0))],
            out_specs=pl.BlockSpec((1, C_out, TILE_OUT), lambda n, t: (n, 0, t)),
        ),
        compiler_params=pltpu.CompilerParams(
            dimension_semantics=("parallel", "parallel"),
            vmem_limit_bytes=vmem_limit,
        ),
        cost_estimate=pl.CostEstimate(
            flops=0,
            transcendentals=0,
            bytes_accessed=int(N * C_out * HW * itemsize + N * C_out * 4),
        ),
    )(y.reshape(N, C_out, 1))

    return out.reshape(N, C_out, H, W)


# ----------------------------------------------------------------------------
# Reference + test.
# ----------------------------------------------------------------------------
def aspp_pooling_reference(x, w_conv, gamma, beta, rm, rv, eps=1e-5):
    pooled = jnp.mean(x, axis=(2, 3), keepdims=True)                     # (N, C_in, 1, 1)
    y = jnp.einsum("nihw,oi->nohw", pooled, w_conv[:, :, 0, 0])          # (N, C_out, 1, 1)
    y = (y - rm[None, :, None, None]) * (gamma / jnp.sqrt(rv + eps))[None, :, None, None] \
        + beta[None, :, None, None]
    y = jnp.maximum(y, 0.0)
    return jnp.broadcast_to(y, (x.shape[0], w_conv.shape[0], x.shape[2], x.shape[3]))


def _run_case(key, N, C_in, C_out, H, W, **kw):
    k_x, k_w, k_g, k_b, k_m, k_v = jax.random.split(key, 6)
    x = jax.random.normal(k_x, (N, C_in, H, W), dtype=jnp.float32)
    w_conv = jax.random.normal(k_w, (C_out, C_in, 1, 1), dtype=jnp.float32) * 0.5
    gamma = 1.0 + 0.1 * jax.random.normal(k_g, (C_out,), dtype=jnp.float32)
    beta = 0.1 * jax.random.normal(k_b, (C_out,), dtype=jnp.float32)
    rm = 0.1 * jax.random.normal(k_m, (C_out,), dtype=jnp.float32)
    rv = 1.0 + 0.1 * jax.random.uniform(k_v, (C_out,), dtype=jnp.float32)

    out = aspp_pooling(x, w_conv, gamma, beta, rm, rv, **kw)
    out = jax.block_until_ready(out)
    ref = aspp_pooling_reference(x, w_conv, gamma, beta, rm, rv)
    np.testing.assert_allclose(np.asarray(out), np.asarray(ref), rtol=1e-5, atol=1e-5)
    assert out.shape == (N, C_out, H, W)


if __name__ == "__main__":
    key = jax.random.PRNGKey(0)
    k1, k2 = jax.random.split(key)

    # Small shapes consistent with the module: batch=2, C_in=4, C_out=8, 16x16.
    _run_case(k1, N=2, C_in=4, C_out=8, H=16, W=16)

    # Exercise the tiled reduction with a masked last tile (HW=576, tile=128 ->
    # 5 tiles) and the multi-tile broadcast path (out tile capped at 256 lanes).
    _run_case(k2, N=2, C_in=4, C_out=8, H=24, W=24,
              reduce_tile_cap=128, out_tile_cap=256)

    print("KERNEL_OK")
</pallas_src>

<mosaic_0001>
module attributes {stable_mosaic.version = 11 : i64} {
  func.func @reduce_kernel(%arg0: i32, %arg1: i32, %arg2: memref<1x4x256xf32, #tpu.memory_space<vmem>>, %arg3: memref<1x4x1xf32, #tpu.memory_space<vmem>>) attributes {dimension_semantics = [#tpu.dimension_semantics<parallel>, #tpu.dimension_semantics<arbitrary>], iteration_bounds = array<i64: 2, 1>, scalar_prefetch = 0 : i64, scratch_operands = 0 : i64, tpu.core_type = #tpu.core_type<tc>, window_params = [{transform_indices = @transform_0, window_bounds = array<i64: 1, 4, 256>}, {transform_indices = @transform_1, window_bounds = array<i64: 1, 4, 1>}]} {
    %c0_i32 = arith.constant 0 : i32
    %0 = arith.cmpi eq, %arg1, %c0_i32 : i32
    %1 = arith.extui %0 : i1 to i32
    %c0_i32_0 = arith.constant 0 : i32
    %2 = arith.cmpi ne, %1, %c0_i32_0 : i32
    scf.if %2 {
      %cst_9 = arith.constant 0.000000e+00 : f32
      %9 = vector.broadcast %cst_9 : f32 to vector<1x4x1xf32>
      %c0_10 = arith.constant 0 : index
      %c0_11 = arith.constant 0 : index
      %c0_12 = arith.constant 0 : index
      %10 = vector.load %arg3[%c0_10, %c0_11, %c0_12] : memref<1x4x1xf32, #tpu.memory_space<vmem>>, vector<1x4x1xf32>
      tpu.vector_store %arg3[%c0_10, %c0_11, %c0_12], %9 {strides = array<i32>} : memref<1x4x1xf32, #tpu.memory_space<vmem>>, vector<1x4x1xf32>,
    } else {
    }
    %c0 = arith.constant 0 : index
    %c0_1 = arith.constant 0 : index
    %c0_2 = arith.constant 0 : index
    %3 = vector.load %arg3[%c0, %c0_1, %c0_2] : memref<1x4x1xf32, #tpu.memory_space<vmem>>, vector<1x4x1xf32>
    %c0_3 = arith.constant 0 : index
    %c0_4 = arith.constant 0 : index
    %c0_5 = arith.constant 0 : index
    %4 = vector.load %arg2[%c0_3, %c0_4, %c0_5] : memref<1x4x256xf32, #tpu.memory_space<vmem>>, vector<1x4x256xf32>
    %cst = arith.constant dense<0.000000e+00> : vector<1x4xf32>
    %5 = vector.multi_reduction <add>, %4, %cst [2] : vector<1x4x256xf32> to vector<1x4xf32>
    %6 = vector.shape_cast %5 : vector<1x4xf32> to vector<1x4x1xf32>
    %7 = arith.addf %3, %6 : vector<1x4x1xf32>
    %c0_6 = arith.constant 0 : index
    %c0_7 = arith.constant 0 : index
    %c0_8 = arith.constant 0 : index
    %8 = vector.load %arg3[%c0_6, %c0_7, %c0_8] : memref<1x4x1xf32, #tpu.memory_space<vmem>>, vector<1x4x1xf32>
    tpu.vector_store %arg3[%c0_6, %c0_7, %c0_8], %7 {strides = array<i32>} : memref<1x4x1xf32, #tpu.memory_space<vmem>>, vector<1x4x1xf32>,
    return
  }
  func.func @transform_0(%arg0: i32, %arg1: i32) -> (i32, i32, i32) {
    %c0_i32 = arith.constant 0 : i32
    %c0_i32_0 = arith.constant 0 : i32
    return %arg0, %c0_i32, %arg1 : i32, i32, i32
  }
  func.func @transform_1(%arg0: i32, %arg1: i32) -> (i32, i32, i32) {
    %c0_i32 = arith.constant 0 : i32
    %c0_i32_0 = arith.constant 0 : i32
    %c0_i32_1 = arith.constant 0 : i32
    return %arg0, %c0_i32, %c0_i32_0 : i32, i32, i32
  }
}

</mosaic_0001>

<llo_original>
// kernel: tpu_custom_call.1
$region0: #{tpu_custom_call.1}
  #allocation0 [shape = 'u32[]', space=smem, size = 0x4, offset = 0x4, fixed_abs, tag = 'smem constant byte address 0x4 - core index']
  #allocation1 [shape = 'u32[72,128]{1,0:T(1,128)}', space=vmem, size = 0x9000, scoped, tag = 'internal scratch']
  %s0 = inlined_call_operand.hbm [shape: f32[2,4,256], index: 0, kind: input, shape index: {}]
  %s1 = inlined_call_operand.vmem [shape: f32[2,4,1], index: 1, kind: output, shape index: {}]
  %s2 = sld [smem:[#allocation0]]
  $region45: #{tpu_custom_call.1} parent=0
    _
  %s4 = ssub.s32 1, %s2
  %s5 = scalar_select 0, %s4, %s2
  $region1: #{tpu_custom_call.1} parent=0
    #allocation2 [shape = 'u8[8192]{0}', space=vmem, size = 0x2000, scoped, tag = 'input window, operand 0']
    #allocation3 [shape = 's32[2]{0}', space=sflag, size = 0x8, scoped, tag = 'scoped memory for tpu_custom_call.1']
    %6 = vsyncpa [#allocation3], 0
    %s7 = scalar_lea.sflag [#allocation3], 1
    %8 = vsyncpa %s7, 0
    loop: start=0, step=1, limit=4
    $region2: #{tpu_custom_call.1} parent=1 // loop_pre_header
      _
    $region3: #{tpu_custom_call.1} parent=1 // loop_header
      %s10 = sphi 0, %s14
      %p11 = scmp.ge.s32.totalorder %s10, 4
      %s17 = sphi 0, %s29
      %s18 = sphi 0, %s25
      %s19 = sphi 0, %s17
      %s20 = sphi 0, %s18
      %s21 = sphi 0, %s19
      %s22 = sphi 0, %s20
      %s34 = sphi 0, %s36
      %s37 = sphi 0, %s34
      %s38 = sphi 0, %s37
      %s54 = sphi 0, %s38
      %s60 = sphi 0, %s62
      %s63 = sphi 0, %s60
      %s64 = sphi 0, %s63
      %s80 = sphi 0, %s64
    $region4: #{tpu_custom_call.1} parent=1 // loop_header_branch
      %13 = sbr.rel (%p11) target = $region8
    $region5: #{tpu_custom_call.1} parent=1 // loop_body
      %s15 = ssub.s32 %s10, 1
      %s16 = ssub.s32 %s10, 2
      %s23 = sadd.s32 1, %s18
      %p24 = scmp.ge.s32.totalorder %s23, 1
      %s25 = scalar_select %p24, 0, %s23
      %s26 = sadd.s32 1, %s17
      %s27 = scalar_select %p24, %s26, %s17
      %p28 = scmp.ge.s32.totalorder %s27, 2
      %s29 = scalar_select %p28, 0, %s27
      %s30 = ssub.s32 %s17, %s29
      %s31 = ssub.s32 %s18, %s25
      %s32 = sor.u32 %s30, %s31
      %p33 = scmp.eq.s32.totalorder %s32, 0
      %s35 = sadd.s32 %s34, 1
      %s36 = scalar_select %p33, %s34, %s35
      %p39 = pneg %p33
      %p40 = scmp.eq.s32.totalorder %s10, 1
      %p41 = por %p39, %p40
      %p42 = scmp.ne.s32.totalorder %s34, %s37
      %p43 = scmp.eq.s32.totalorder %s10, 0
      %p44 = por %p42, %p43
      %p45 = scmp.ne.s32.totalorder %s34, %s37
      %p46 = scmp.eq.s32.totalorder %s15, 1
      %p47 = por %p45, %p46
      %p48 = scmp.ne.s32.totalorder %s37, %s38
      %p49 = scmp.eq.s32.totalorder %s15, 0
      %p50 = por %p48, %p49
      %p51 = scmp.ne.s32.totalorder %s37, %s38
      %p52 = scmp.eq.s32.totalorder %s16, 1
      %p53 = por %p51, %p52
      %p55 = scmp.ne.s32.totalorder %s38, %s54
      %p56 = scmp.eq.s32.totalorder %s16, 0
      %p57 = por %p55, %p56
      %s58 = ssub.s32 %s17, %s29
      %p59 = scmp.eq.s32.totalorder %s58, 0
      %s61 = sadd.s32 %s60, 1
      %s62 = scalar_select %p59, %s60, %s61
      %p65 = pneg %p59
      %p66 = scmp.eq.s32.totalorder %s10, 1
      %p67 = por %p65, %p66
      %p68 = scmp.ne.s32.totalorder %s60, %s63
      %p69 = scmp.eq.s32.totalorder %s10, 0
      %p70 = por %p68, %p69
      %p71 = scmp.ne.s32.totalorder %s60, %s63
      %p72 = scmp.eq.s32.totalorder %s15, 1
      %p73 = por %p71, %p72
      %p74 = scmp.ne.s32.totalorder %s63, %s64
      %p75 = scmp.eq.s32.totalorder %s15, 0
      %p76 = por %p74, %p75
      %p77 = scmp.ne.s32.totalorder %s63, %s64
      %p78 = scmp.eq.s32.totalorder %s16, 1
      %p79 = por %p77, %p78
      %p81 = scmp.ne.s32.totalorder %s64, %s80
      %p82 = scmp.eq.s32.totalorder %s16, 0
      %p83 = por %p81, %p82
      %p84 = scmp.le.s32.totalorder 1, %s10
      %p85 = scmp.lt.s32.totalorder %s10, 3
      %p86 = pnand %p84, %p85
      %p87 = pneg %p86
      // Predicated region
      $region9: #{tpu_custom_call.1} parent=5 // pred_check
        _
      $region10: #{tpu_custom_call.1} parent=5 // pred_check_branch
        %89 = sbr.rel (%p86) target = $region12
      $region11: #{tpu_custom_call.1} parent=5 // pred_region
        %s90 = ssub.s32 %s10, 1
      $region12: #{tpu_custom_call.1} parent=5 // pred_fallthru
        _
      %p91 = scmp.lt.s32.totalorder %s10, 2
      // Predicated region
      $region13: #{tpu_custom_call.1} parent=5 // pred_check
        %p92 = pneg %p91
      $region14: #{tpu_custom_call.1} parent=5 // pred_check_branch
        %94 = sbr.rel (%p92) target = $region16
      $region15: #{tpu_custom_call.1} parent=5 // pred_region
        // Predicated region
        $region17: #{tpu_custom_call.1} parent=15 // pred_check
          %p95 = pneg %p44
        $region18: #{tpu_custom_call.1} parent=15 // pred_check_branch
          %97 = sbr.rel (%p95) target = $region20
        $region19: #{tpu_custom_call.1} parent=15 // pred_region
          %s98 = sand.u32 %s34, 1
          %s99 = scalar_lea.sflag [#allocation3], %s98
          %s100 = sand.u32 %s34, 1
          %s101 = smul.addr %s100, 8
          %s102 = scalar_lea.vmem [#allocation2], %s101
          %s103 = smul.u32 2, %s18
          %105 = vsyncadd %s99, 0
          %s106 = smul.addr %s17, 2
          %s107 = sadd.s32 %s103, %s106
          %s108 = smul.addr %s107, 4
          %s109 = scalar_lea.hbm %s0, %s108
          %s111 = sshll.u32 %s109, 4
          %s112 = int_to_ptr.hbm [resolvable:$true] %s111
          %s113 = sshll.u32 %s102, 4
          %s114 = int_to_ptr.vmem [resolvable:$true] %s113
          %116 = dma.hbm_to_vmem [thread:$0]  %s112, 128, %s114, %s99
        $region20: #{tpu_custom_call.1} parent=15 // pred_fallthru
          _
      $region16: #{tpu_custom_call.1} parent=5 // pred_fallthru
        _
      %p117 = scmp.le.s32.totalorder 1, %s10
      %p118 = scmp.lt.s32.totalorder %s10, 3
      %p119 = pnand %p117, %p118
      %p120 = pneg %p119
      // Predicated region
      $region21: #{tpu_custom_call.1} parent=5 // pred_check
        _
      $region22: #{tpu_custom_call.1} parent=5 // pred_check_branch
        %122 = sbr.rel (%p119) target = $region24
      $region23: #{tpu_custom_call.1} parent=5 // pred_region
        %s123 = ssub.s32 %s10, 1
        %s124 = sand.u32 %s37, 1
        %s125 = scalar_lea.sflag [#allocation3], %s124
        %s126 = sand.u32 %s37, 1
        %s127 = smul.addr %s126, 8
        %s128 = scalar_lea.vmem [#allocation2], %s127
        // Predicated region
        $region25: #{tpu_custom_call.1} parent=23 // pred_check
          %p129 = pneg %p50
        $region26: #{tpu_custom_call.1} parent=23 // pred_check_branch
          %131 = sbr.rel (%p129) target = $region28
        $region27: #{tpu_custom_call.1} parent=23 // pred_region
          %133 = dma.done %s125, 128
        $region28: #{tpu_custom_call.1} parent=23 // pred_fallthru
          _
        %s134 = sand.u32 %s37, 1
        %s135 = scalar_lea.sflag [#allocation3], %s134
        %s136 = sand.u32 %s37, 1
        %s137 = smul.addr %s136, 8
        %s138 = scalar_lea.vmem [#allocation2], %s137
        %p139 = pneg %p50
        %p140 = pneg %p47
        %p141 = pneg %p76
        %p142 = pneg %p73
        %p143 = scmp.lt.s32.totalorder %s19, 1
        %s144 = scalar_select %p143, %s19, 1
        %s145 = smul.addr %s144, 4
        %s146 = scalar_lea.vmem %s1, %s145
        %s147 = smul.u32 2, %s20
        %p148 = scmp.lt.s32.totalorder %s19, 1
        %s149 = scalar_select %p148, %s19, 1
        %s150 = smul.addr %s149, 4
        %s151 = scalar_lea.vmem %s1, %s150
        %p152 = scmp.eq.s32.totalorder %s20, 0
        // Predicated region
        $region29: #{tpu_custom_call.1} parent=23 // pred_check
          %p153 = pneg %p152
        $region30: #{tpu_custom_call.1} parent=23 // pred_check_branch
          %155 = sbr.rel (%p153) target = $region32
        $region31: #{tpu_custom_call.1} parent=23 // pred_region
          %vm156 = vcmask 3072
          %157 = vst.msk [vmem:[%s151] sm:$0xf] %vm156, 0.0
        $region32: #{tpu_custom_call.1} parent=23 // pred_fallthru
          _
        %v158 = vld [vmem:[%s151] sm:$0xf]
        %v159 = vld [vmem:[%s128] sm:$0xff]
        %161 = vst [vmem:[#allocation1] ss:$2 sm:$0xff] %v159
        %v162 = vld.sshfl [vmem:[#allocation1] sm:$0xff pattern:$0x75316420]
        %v163 = vld.sshfl [vmem:[#allocation1 + $0x8] sm:$0xff pattern:$0x75316420]
        %vm166 = vcmask 1043456
        %v167 = vsel %vm166, %v162, 0.0
        %v168 = vsel %vm166, %v163, 0.0
        %v169 = vadd.f32 %v167, %v168
        %170 = vadd.xlane.f32.xlu0 %v169
        %v171 = vpop.xlane.xlu0 %170
        %v172 = vadd.f32 %v158, %v171
        %vm173 = vcmask 3072
        %174 = vst.msk [vmem:[%s151] sm:$0xf] %vm173, %v172
        %p175 = scmp.lt.s32.totalorder %s19, 1
        %s176 = scalar_select %p175, %s19, 1
        %s177 = smul.addr %s176, 4
        %s178 = scalar_lea.vmem %s1, %s177
        // Predicated region
        $region33: #{tpu_custom_call.1} parent=23 // pred_check
          %p179 = pneg %p73
        $region34: #{tpu_custom_call.1} parent=23 // pred_check_branch
          %181 = sbr.rel (%p179) target = $region36
        $region35: #{tpu_custom_call.1} parent=23 // pred_region
          _
        $region36: #{tpu_custom_call.1} parent=23 // pred_fallthru
          _
      $region24: #{tpu_custom_call.1} parent=5 // pred_fallthru
        _
      %p182 = scmp.le.s32.totalorder 2, %s10
      // Predicated region
      $region37: #{tpu_custom_call.1} parent=5 // pred_check
        %p183 = pneg %p182
      $region38: #{tpu_custom_call.1} parent=5 // pred_check_branch
        %185 = sbr.rel (%p183) target = $region40
      $region39: #{tpu_custom_call.1} parent=5 // pred_region
        %s186 = ssub.s32 %s10, 2
        // Predicated region
        $region41: #{tpu_custom_call.1} parent=39 // pred_check
          %p187 = pneg %p79
        $region42: #{tpu_custom_call.1} parent=39 // pred_check_branch
          %189 = sbr.rel (%p187) target = $region44
        $region43: #{tpu_custom_call.1} parent=39 // pred_region
          %p190 = scmp.lt.s32.totalorder %s21, 1
          %s191 = scalar_select %p190, %s21, 1
          %s192 = smul.addr %s191, 4
          %s193 = scalar_lea.vmem %s1, %s192
        $region44: #{tpu_custom_call.1} parent=39 // pred_fallthru
          _
      $region40: #{tpu_custom_call.1} parent=5 // pred_fallthru
        _
    $region6: #{tpu_custom_call.1} parent=1 // loop_footer
      %s14 = sadd.s32 1, %s10
    $region7: #{tpu_custom_call.1} parent=1 // loop_footer_branch
      %9 = sbr.rel target = $region3
    $region8: #{tpu_custom_call.1} parent=1 // loop_exit
      _
    %194 = vsyncpa [#allocation3], 1
    %s195 = scalar_lea.sflag [#allocation3], 1
    %196 = vsyncpa %s195, 1

</llo_original>
